<compile_context>
chip_gen: v7x
topology: tpu7x:2x2x1
jax: 0.10.0
libtpu: 0.0.40
codegen_flags: <defaults>
</compile_context>

<pallas_src>
import math

import jax
import jax.numpy as jnp
from jax.experimental import pallas as pl
from jax.experimental.pallas import tpu as pltpu


def make_positional_encoding_table(d_model, max_len=5000, dtype=jnp.float32):
    """Precompute the [max_len, d_model] sin/cos table (register_buffer analogue)."""
    position = jnp.arange(max_len, dtype=jnp.float32)[:, None]                 # [L, 1]
    div_term = jnp.exp(
        jnp.arange(0, d_model, 2, dtype=jnp.float32) * -(math.log(10000.0) / d_model)
    )                                                                          # [D/2]
    angles = position * div_term                                               # [L, D/2]
    pe = jnp.zeros((max_len, d_model), dtype=jnp.float32)
    pe = pe.at[:, 0::2].set(jnp.sin(angles))
    pe = pe.at[:, 1::2].set(jnp.cos(angles))
    return pe.astype(dtype)


def _pos_enc_kernel(x_ref, pe_ref, o_ref):
    # x_ref: [bb, tn], pe_ref: [1, tn]  ->  broadcast-add over the rows.
    # Dropout = identity (inference).
    o_ref[...] = x_ref[...] + pe_ref[...]


def _round_down(a, m):
    return (a // m) * m


def _choose_tiles(B, N, itemsize, target_bytes):
    """Pick (bb, tn) tile sizes for a lane-dense (B, N) elementwise kernel.

    bb is a multiple of 8 (or == B), tn is a multiple of 128 (or == N), so the
    (8, 128) block-shape constraint is always satisfied.
    """
    row_bytes = N * itemsize
    # Column tile: take the full row if an 8-row strip fits the target,
    # otherwise chop the row into 128-lane-aligned chunks.
    if 8 * row_bytes <= target_bytes or N <= 128:
        tn = N
    else:
        tn = max(128, _round_down(target_bytes // (8 * itemsize), 128))
        tn = min(tn, _round_down(N, 128))
    tile_row_bytes = tn * itemsize
    # Row (batch) tile: as many rows as fit the target, in multiples of 8.
    if B * tile_row_bytes <= target_bytes:
        bb = B
    else:
        bb = max(8, _round_down(target_bytes // tile_row_bytes, 8))
        bb = min(bb, B)
    return bb, tn


def positional_encoding_forward(x, pe, *, force_pallas=False,
                                target_tile_bytes=4 * 1024 * 1024):
    """x: [B, S, d_model]; pe: [max_len, d_model] precomputed buffer."""
    B, S, D = x.shape
    itemsize = x.dtype.itemsize
    pe_s = pe[:S].astype(x.dtype)       # static slice + single cast of the buffer

    # Tiny shapes: XLA's fused broadcast-add beats the custom-call overhead.
    if not force_pallas and B * S * D * itemsize <= (64 << 10):
        return x + pe_s[None]

    # Lane-dense flattening: last dim becomes S*D (always a nice multiple of
    # the lane width for realistic d_model; dense even when D < 128).
    N = S * D
    x2 = x.reshape(B, N)
    pe2 = pe_s.reshape(1, N)

    bb, tn = _choose_tiles(B, N, itemsize, target_tile_bytes)
    grid_b = pl.cdiv(B, bb)
    grid_n = pl.cdiv(N, tn)

    # Megacore (v7x): if everything collapsed into a single step but the
    # tensor is big enough to care, split the batch so both TCs get work.
    if grid_b * grid_n == 1 and B >= 16 and B * N * itemsize >= (2 << 20):
        bb = max(8, _round_down((B + 1) // 2, 8))
        grid_b = pl.cdiv(B, bb)

    # VMEM footprint: double-buffered x tile + out tile + pe tile.
    footprint = 4 * bb * tn * itemsize + 2 * tn * itemsize
    try:
        vmem_cap = int(pltpu.get_tpu_info().vmem_capacity_bytes)
    except Exception:
        vmem_cap = 64 * 1024 * 1024     # v7x per-TC capacity (most conservative)
    vmem_limit = max(1 << 20, min(vmem_cap - (4 << 20), footprint + (4 << 20)))

    out2 = pl.pallas_call(
        _pos_enc_kernel,
        out_shape=jax.ShapeDtypeStruct((B, N), x.dtype),
        grid=(grid_b, grid_n),
        in_specs=[
            pl.BlockSpec((bb, tn), lambda i, j: (i, j)),   # x tile
            pl.BlockSpec((1, tn), lambda i, j: (0, j)),    # pe slice (shared over rows)
        ],
        out_specs=pl.BlockSpec((bb, tn), lambda i, j: (i, j)),
        compiler_params=pltpu.CompilerParams(
            dimension_semantics=("parallel", "parallel"),
            vmem_limit_bytes=int(vmem_limit),
        ),
    )(x2, pe2)

    return out2.reshape(B, S, D)        # free metadata reshape


def _reference_forward(x, pe):
    """Pure-JAX reference replicating the PyTorch forward (eval mode)."""
    return x + pe[: x.shape[1]].astype(x.dtype)[None, :, :]


if __name__ == "__main__":
    B, S, D_MODEL, MAX_LEN = 2, 8, 32, 5000

    key = jax.random.PRNGKey(0)
    x = jax.random.normal(key, (B, S, D_MODEL), jnp.float32)

    # __init__ analogue: build the buffer once (dropout p irrelevant at inference).
    pe = make_positional_encoding_table(D_MODEL, MAX_LEN)

    # 1) Small test shape, forcing the Pallas path so the kernel itself runs.
    out = positional_encoding_forward(x, pe, force_pallas=True)
    out = jax.block_until_ready(out)
    ref = _reference_forward(x, pe)
    assert out.shape == (B, S, D_MODEL)
    assert out.dtype == x.dtype
    assert jnp.allclose(out, ref, atol=1e-6, rtol=1e-6)

    # 2) bf16 input exercises the pe-cast path.
    x_bf16 = x.astype(jnp.bfloat16)
    out_bf = jax.block_until_ready(
        positional_encoding_forward(x_bf16, pe, force_pallas=True)
    )
    assert out_bf.dtype == jnp.bfloat16
    assert jnp.allclose(out_bf.astype(jnp.float32),
                        _reference_forward(x_bf16, pe).astype(jnp.float32),
                        atol=1e-2, rtol=1e-2)

    # 3) Medium shape with an artificially small tile budget to exercise the
    #    2-D grid (partial last column block + multiple parallel batch tiles).
    B2, S2, D2 = 16, 64, 48
    x2 = jax.random.normal(jax.random.PRNGKey(1), (B2, S2, D2), jnp.float32)
    pe2 = make_positional_encoding_table(D2, 256)
    out2 = jax.block_until_ready(
        positional_encoding_forward(x2, pe2, force_pallas=True,
                                    target_tile_bytes=64 * 1024)
    )
    assert jnp.allclose(out2, _reference_forward(x2, pe2), atol=1e-6, rtol=1e-6)

    print("KERNEL_OK")
</pallas_src>

<mosaic_0001>
module attributes {stable_mosaic.version = 11 : i64} {
  func.func @_pos_enc_kernel(%arg0: i32, %arg1: i32, %arg2: memref<2x256xf32, #tpu.memory_space<vmem>>, %arg3: memref<1x256xf32, #tpu.memory_space<vmem>>, %arg4: memref<2x256xf32, #tpu.memory_space<vmem>>) attributes {dimension_semantics = [#tpu.dimension_semantics<parallel>, #tpu.dimension_semantics<parallel>], iteration_bounds = array<i64: 1, 1>, scalar_prefetch = 0 : i64, scratch_operands = 0 : i64, tpu.core_type = #tpu.core_type<tc>, window_params = [{transform_indices = @transform_0, window_bounds = array<i64: 2, 256>}, {transform_indices = @transform_1, window_bounds = array<i64: 1, 256>}, {transform_indices = @transform_2, window_bounds = array<i64: 2, 256>}]} {
    %c0 = arith.constant 0 : index
    %c0_0 = arith.constant 0 : index
    %0 = vector.load %arg2[%c0, %c0_0] : memref<2x256xf32, #tpu.memory_space<vmem>>, vector<2x256xf32>
    %c0_1 = arith.constant 0 : index
    %c0_2 = arith.constant 0 : index
    %1 = vector.load %arg3[%c0_1, %c0_2] : memref<1x256xf32, #tpu.memory_space<vmem>>, vector<1x256xf32>
    %2 = vector.broadcast %1 : vector<1x256xf32> to vector<2x256xf32>
    %3 = arith.addf %0, %2 : vector<2x256xf32>
    %c0_3 = arith.constant 0 : index
    %c0_4 = arith.constant 0 : index
    %4 = vector.load %arg4[%c0_3, %c0_4] : memref<2x256xf32, #tpu.memory_space<vmem>>, vector<2x256xf32>
    tpu.vector_store %arg4[%c0_3, %c0_4], %3 {strides = array<i32>} : memref<2x256xf32, #tpu.memory_space<vmem>>, vector<2x256xf32>,
    return
  }
  func.func @transform_0(%arg0: i32, %arg1: i32) -> (i32, i32) {
    %c0_i32 = arith.constant 0 : i32
    return %arg0, %arg1 : i32, i32
  }
  func.func @transform_1(%arg0: i32, %arg1: i32) -> (i32, i32) {
    %c0_i32 = arith.constant 0 : i32
    %c0_i32_0 = arith.constant 0 : i32
    return %c0_i32, %arg1 : i32, i32
  }
  func.func @transform_2(%arg0: i32, %arg1: i32) -> (i32, i32) {
    %c0_i32 = arith.constant 0 : i32
    return %arg0, %arg1 : i32, i32
  }
}

</mosaic_0001>

<llo_original>
// kernel: tpu_custom_call.1
$region0: #{tpu_custom_call.1}
  #allocation0 [shape = 'u32[]', space=smem, size = 0x4, offset = 0x4, fixed_abs, tag = 'smem constant byte address 0x4 - core index']
  #allocation1 [shape = 'u32[144,128]{1,0:T(1,128)}', space=vmem, size = 0x12000, scoped, tag = 'internal scratch']
  %s0 = inlined_call_operand.hbm [shape: f32[2,256], index: 0, kind: input, shape index: {}]
  %s1 = inlined_call_operand.vmem [shape: f32[1,256], index: 1, kind: input, shape index: {}]
  %s2 = inlined_call_operand.hbm [shape: f32[2,256], index: 2, kind: output, shape index: {}]
  %s3 = sld [smem:[#allocation0]]
  $region22: #{tpu_custom_call.1} parent=0
    _
  %s5 = ssub.s32 1, %s3
  %s6 = scalar_select 0, %s5, %s3
  $region1: #{tpu_custom_call.1} parent=0
    #allocation2 [shape = 'u8[2048]{0}', space=vmem, size = 0x800, scoped, tag = 'input window, operand 0, single buffered']
    #allocation3 [shape = 's32[1]{0}', space=sflag, size = 0x4, scoped, tag = 'scoped memory for tpu_custom_call.1']
    #allocation4 [shape = 's32[1]{0}', space=sflag, size = 0x4, scoped, tag = 'scoped memory for tpu_custom_call.1']
    #allocation5 [shape = 'u8[2048]{0}', space=vmem, size = 0x800, scoped, tag = 'output window, operand 0, single buffered']
    %7 = vsyncpa [#allocation3], 0
    %8 = vsyncpa [#allocation4], 0
    // Predicated region
    $region2: #{tpu_custom_call.1} parent=1 // pred_check
      _
    $region3: #{tpu_custom_call.1} parent=1 // pred_check_branch
      %10 = sbr.rel (0) target = $region5
    $region4: #{tpu_custom_call.1} parent=1 // pred_region
      %s12 = ssub.s32 64, 64
      %13 = vsyncadd [#allocation3], %s12
      %s15 = sshll.u32 [#allocation2], 4
      %s16 = int_to_ptr.vmem [resolvable:$true] %s15
      %18 = dma.hbm_to_vmem [thread:$0]  %s0, 64, %s16, [#allocation3]
    $region5: #{tpu_custom_call.1} parent=1 // pred_fallthru
      _
    // Predicated region
    $region6: #{tpu_custom_call.1} parent=1 // pred_check
      _
    $region7: #{tpu_custom_call.1} parent=1 // pred_check_branch
      %20 = sbr.rel (0) target = $region9
    $region8: #{tpu_custom_call.1} parent=1 // pred_region
      _
    $region9: #{tpu_custom_call.1} parent=1 // pred_fallthru
      _
    // Predicated region
    $region10: #{tpu_custom_call.1} parent=1 // pred_check
      _
    $region11: #{tpu_custom_call.1} parent=1 // pred_check_branch
      %22 = sbr.rel (0) target = $region13
    $region12: #{tpu_custom_call.1} parent=1 // pred_region
      %23 = dma.done [#allocation3], 64
    $region13: #{tpu_custom_call.1} parent=1 // pred_fallthru
      _
    %v24 = vld [vmem:[#allocation2] sm:$0xf]
    %v25 = vld [vmem:[%s1] sm:$0x3]
    %v27 = vlaneseq
    %v28 = vshrl.u32 %v27, 7
    %v29 = vsub.s32 0, %v28
    %v30 = vrot.slane %v25, %v29
    %v31 = vlaneseq
    %v32 = vshrl.u32 %v31, 7
    %v33 = vsub.s32 1, %v32
    %v34 = vrot.slane %v25, %v33
    %v35 = vcombine.low %v30, %v34
    %v37 = vunpack.c.l.s4 1983009808
    %v38 = vunpack.c.0.s8 %v37
    %v39 = vlaneseq
    %v40 = vshrl.u32 %v39, 7
    %v41 = vsub.s32 %v38, %v40
    %v42 = vrot.slane %v35, %v41
    %v44 = vadd.f32 %v24, %v42
    %45 = vst [vmem:[#allocation5] sm:$0xf] %v44
    // Predicated region
    $region14: #{tpu_custom_call.1} parent=1 // pred_check
      _
    $region15: #{tpu_custom_call.1} parent=1 // pred_check_branch
      %47 = sbr.rel (0) target = $region17
    $region16: #{tpu_custom_call.1} parent=1 // pred_region
      %s49 = ssub.s32 64, 64
      %50 = vsyncadd [#allocation4], %s49
      %s52 = sshll.u32 [#allocation5], 4
      %s53 = int_to_ptr.vmem [resolvable:$true] %s52
      %55 = dma.vmem_to_hbm [thread:$0]  %s53, 64, %s2, [#allocation4]
    $region17: #{tpu_custom_call.1} parent=1 // pred_fallthru
      _
    // Predicated region
    $region18: #{tpu_custom_call.1} parent=1 // pred_check
      _
    $region19: #{tpu_custom_call.1} parent=1 // pred_check_branch
      %57 = sbr.rel (0) target = $region21
    $region20: #{tpu_custom_call.1} parent=1 // pred_region
      %58 = dma.done [#allocation4], 64
    $region21: #{tpu_custom_call.1} parent=1 // pred_fallthru
      _
    %59 = vsyncpa [#allocation3], 1
    %60 = vsyncpa [#allocation4], 1

</llo_original>
